<compile_context>
chip_gen: v7x
topology: tpu7x:2x2x1
jax: 0.10.0
libtpu: 0.0.40
codegen_flags: <defaults>
</compile_context>

<pallas_src>
import jax
import jax.numpy as jnp
from jax.experimental import pallas as pl
from jax.experimental.pallas import tpu as pltpu

_LANES = 128
# 1024 rows * 128 lanes * 4 B = 512 KiB per input tile.
# 2 inputs x 2 pipeline buffers -> ~2 MiB VMEM: safe on v5e/v6e/v7x and large
# enough to amortize the ~0.35 us per-grid-step pipeline overhead.
_MAX_TILE_ROWS = 1024


def _l1_partial_kernel(p_ref, y_ref, out_ref):
    # Tiles are lane-dense (TILE_ROWS, 128).  Reduce over the sublane axis only
    # so the per-tile partial stays lane-dense (1, 128) -> unmasked vector
    # stores (important on v5e's single store slot).
    p = p_ref[...].astype(jnp.float32)
    y = y_ref[...].astype(jnp.float32)
    out_ref[...] = jnp.sum(jnp.abs(p - y), axis=0, keepdims=True)


def _round_up(x, m):
    return ((x + m - 1) // m) * m


def l1_loss_pallas(pred, gt):
    assert pred.shape == gt.shape, (pred.shape, gt.shape)
    n = pred.size

    # Flatten contiguously (no transpose / layout shuffle -> no extra HBM pass).
    p = pred.reshape(-1)
    y = gt.reshape(-1)

    rows_needed = _round_up(n, _LANES) // _LANES
    tile_rows = min(_MAX_TILE_ROWS, _round_up(rows_needed, 8))
    rows = _round_up(rows_needed, tile_rows)
    padded = rows * _LANES
    if padded != n:
        # Zero padding contributes |0 - 0| = 0 to the sum.
        p = jnp.pad(p, (0, padded - n))
        y = jnp.pad(y, (0, padded - n))

    p2 = p.reshape(rows, _LANES)
    y2 = y.reshape(rows, _LANES)
    num_tiles = rows // tile_rows

    partials = pl.pallas_call(
        _l1_partial_kernel,
        grid=(num_tiles,),
        in_specs=[
            pl.BlockSpec((tile_rows, _LANES), lambda i: (i, 0)),
            pl.BlockSpec((tile_rows, _LANES), lambda i: (i, 0)),
        ],
        out_specs=pl.BlockSpec((1, _LANES), lambda i: (i, 0)),
        out_shape=jax.ShapeDtypeStruct((num_tiles, _LANES), jnp.float32),
        compiler_params=pltpu.CompilerParams(
            # Independent per-tile partials -> fully parallel grid axis
            # (lets v7x shard tiles across both TensorCores).
            dimension_semantics=("parallel",),
            vmem_limit_bytes=32 * 1024 * 1024,
        ),
    )(p2, y2)

    # Tiny final reduction + mean in plain JAX (glue only).
    return jnp.sum(partials) / n


class L1_loss:
    """JAX/Pallas port of criterions.criterion.L1_loss (nn.L1Loss, mean)."""

    def __init__(self, cfg) -> None:
        self.cfg = cfg

    def forward(self, pred_dict, gt_dict):
        return l1_loss_pallas(pred_dict["y_hat"], gt_dict["y"])

    __call__ = forward


if __name__ == "__main__":
    key = jax.random.PRNGKey(0)
    k1, k2 = jax.random.split(key)
    B, C, H, W = 2, 4, 16, 16
    y_hat = jax.random.normal(k1, (B, C, H, W), jnp.float32)
    y = jax.random.normal(k2, (B, C, H, W), jnp.float32)

    criterion = L1_loss(cfg={})
    loss = criterion({"y_hat": y_hat}, {"y": y})
    loss = jax.block_until_ready(loss)

    ref = jnp.mean(jnp.abs(y_hat - y))
    assert jnp.allclose(loss, ref, rtol=1e-5, atol=1e-6), (float(loss), float(ref))
    print("KERNEL_OK")
</pallas_src>

<mosaic_0001>
module attributes {stable_mosaic.version = 11 : i64} {
  func.func @_l1_partial_kernel(%arg0: i32, %arg1: memref<16x128xf32, #tpu.memory_space<vmem>>, %arg2: memref<16x128xf32, #tpu.memory_space<vmem>>, %arg3: memref<1x128xf32, #tpu.memory_space<vmem>>) attributes {dimension_semantics = [#tpu.dimension_semantics<parallel>], iteration_bounds = array<i64: 1>, scalar_prefetch = 0 : i64, scratch_operands = 0 : i64, tpu.core_type = #tpu.core_type<tc>, window_params = [{transform_indices = @transform_0, window_bounds = array<i64: 16, 128>}, {transform_indices = @transform_1, window_bounds = array<i64: 16, 128>}, {transform_indices = @transform_2, window_bounds = array<i64: 1, 128>}]} {
    %c0 = arith.constant 0 : index
    %c0_0 = arith.constant 0 : index
    %0 = vector.load %arg1[%c0, %c0_0] : memref<16x128xf32, #tpu.memory_space<vmem>>, vector<16x128xf32>
    %c0_1 = arith.constant 0 : index
    %c0_2 = arith.constant 0 : index
    %1 = vector.load %arg2[%c0_1, %c0_2] : memref<16x128xf32, #tpu.memory_space<vmem>>, vector<16x128xf32>
    %2 = arith.subf %0, %1 : vector<16x128xf32>
    %3 = math.absf %2 : vector<16x128xf32>
    %cst = arith.constant dense<0.000000e+00> : vector<128xf32>
    %4 = vector.multi_reduction <add>, %3, %cst [0] : vector<16x128xf32> to vector<128xf32>
    %5 = vector.shape_cast %4 : vector<128xf32> to vector<1x128xf32>
    %c0_3 = arith.constant 0 : index
    %c0_4 = arith.constant 0 : index
    %6 = vector.load %arg3[%c0_3, %c0_4] : memref<1x128xf32, #tpu.memory_space<vmem>>, vector<1x128xf32>
    tpu.vector_store %arg3[%c0_3, %c0_4], %5 {strides = array<i32>} : memref<1x128xf32, #tpu.memory_space<vmem>>, vector<1x128xf32>,
    return
  }
  func.func @transform_0(%arg0: i32) -> (i32, i32) {
    %c0_i32 = arith.constant 0 : i32
    %c0_i32_0 = arith.constant 0 : i32
    return %arg0, %c0_i32 : i32, i32
  }
  func.func @transform_1(%arg0: i32) -> (i32, i32) {
    %c0_i32 = arith.constant 0 : i32
    %c0_i32_0 = arith.constant 0 : i32
    return %arg0, %c0_i32 : i32, i32
  }
  func.func @transform_2(%arg0: i32) -> (i32, i32) {
    %c0_i32 = arith.constant 0 : i32
    %c0_i32_0 = arith.constant 0 : i32
    return %arg0, %c0_i32 : i32, i32
  }
}

</mosaic_0001>

<llo_original>
// kernel: tpu_custom_call.1
$region0: #{tpu_custom_call.1}
  #allocation0 [shape = 'u32[]', space=smem, size = 0x4, offset = 0x4, fixed_abs, tag = 'smem constant byte address 0x4 - core index']
  #allocation1 [shape = 'u32[144,128]{1,0:T(1,128)}', space=vmem, size = 0x12000, scoped, tag = 'internal scratch']
  %s0 = inlined_call_operand.hbm [shape: f32[16,128], index: 0, kind: input, shape index: {}]
  %s1 = inlined_call_operand.hbm [shape: f32[16,128], index: 1, kind: input, shape index: {}]
  %s2 = inlined_call_operand.hbm [shape: f32[1,128], index: 2, kind: output, shape index: {}]
  %s3 = sld [smem:[#allocation0]]
  $region26: #{tpu_custom_call.1} parent=0
    _
  %s5 = ssub.s32 1, %s3
  %s6 = scalar_select 0, %s5, %s3
  $region1: #{tpu_custom_call.1} parent=0
    #allocation2 [shape = 'u8[8192]{0}', space=vmem, size = 0x2000, scoped, tag = 'input window, operand 0, single buffered']
    #allocation3 [shape = 's32[1]{0}', space=sflag, size = 0x4, scoped, tag = 'scoped memory for tpu_custom_call.1']
    #allocation4 [shape = 's32[1]{0}', space=sflag, size = 0x4, scoped, tag = 'scoped memory for tpu_custom_call.1']
    #allocation5 [shape = 'u8[8192]{0}', space=vmem, size = 0x2000, scoped, tag = 'input window, operand 1, single buffered']
    #allocation6 [shape = 's32[1]{0}', space=sflag, size = 0x4, scoped, tag = 'scoped memory for tpu_custom_call.1']
    #allocation7 [shape = 'u8[512]{0}', space=vmem, size = 0x400, scoped, tag = 'output window, operand 0, single buffered']
    %7 = vsyncpa [#allocation3], 0
    %8 = vsyncpa [#allocation6], 0
    %9 = vsyncpa [#allocation4], 0
    // Predicated region
    $region2: #{tpu_custom_call.1} parent=1 // pred_check
      _
    $region3: #{tpu_custom_call.1} parent=1 // pred_check_branch
      %11 = sbr.rel (0) target = $region5
    $region4: #{tpu_custom_call.1} parent=1 // pred_region
      %s13 = ssub.s32 256, 256
      %14 = vsyncadd [#allocation3], %s13
      %s15 = sshll.u32 [#allocation2], 4
      %s16 = int_to_ptr.vmem [resolvable:$true] %s15
      %21 = dma.hbm_to_vmem [thread:$0]  %s0, 256, %s16, [#allocation3], 128, 128, 8
    $region5: #{tpu_custom_call.1} parent=1 // pred_fallthru
      _
    // Predicated region
    $region6: #{tpu_custom_call.1} parent=1 // pred_check
      _
    $region7: #{tpu_custom_call.1} parent=1 // pred_check_branch
      %23 = sbr.rel (0) target = $region9
    $region8: #{tpu_custom_call.1} parent=1 // pred_region
      %s25 = ssub.s32 256, 256
      %26 = vsyncadd [#allocation6], %s25
      %s27 = sshll.u32 [#allocation5], 4
      %s28 = int_to_ptr.vmem [resolvable:$true] %s27
      %33 = dma.hbm_to_vmem [thread:$0]  %s1, 256, %s28, [#allocation6], 128, 128, 8
    $region9: #{tpu_custom_call.1} parent=1 // pred_fallthru
      _
    // Predicated region
    $region10: #{tpu_custom_call.1} parent=1 // pred_check
      _
    $region11: #{tpu_custom_call.1} parent=1 // pred_check_branch
      %35 = sbr.rel (0) target = $region13
    $region12: #{tpu_custom_call.1} parent=1 // pred_region
      %36 = dma.done [#allocation3], 256
    $region13: #{tpu_custom_call.1} parent=1 // pred_fallthru
      _
    // Predicated region
    $region14: #{tpu_custom_call.1} parent=1 // pred_check
      _
    $region15: #{tpu_custom_call.1} parent=1 // pred_check_branch
      %38 = sbr.rel (0) target = $region17
    $region16: #{tpu_custom_call.1} parent=1 // pred_region
      %39 = dma.done [#allocation6], 256
    $region17: #{tpu_custom_call.1} parent=1 // pred_fallthru
      _
    %v40 = vld [vmem:[#allocation2] sm:$0xff]
    %v41 = vld [vmem:[#allocation2 + $0x8] sm:$0xff]
    %v42 = vld [vmem:[#allocation5] sm:$0xff]
    %v43 = vld [vmem:[#allocation5 + $0x8] sm:$0xff]
    %v44 = vsub.f32 %v40, %v42
    %v45 = vsub.f32 %v41, %v43
    %v46 = vand.u32 2147483647, %v44
    %v47 = vand.u32 2147483647, %v45
    %v48 = vadd.f32 %v46, %v47
    %v49 = vrot.slane %v48, 4
    %v50 = vadd.f32 %v48, %v49
    %v51 = vrot.slane %v50, 2
    %v52 = vadd.f32 %v50, %v51
    %v53 = vrot.slane %v52, 1
    %v54 = vadd.f32 %v52, %v53
    %55 = vst [vmem:[#allocation7] sm:$0x1] %v54
    // Predicated region
    $region18: #{tpu_custom_call.1} parent=1 // pred_check
      _
    $region19: #{tpu_custom_call.1} parent=1 // pred_check_branch
      %57 = sbr.rel (0) target = $region21
    $region20: #{tpu_custom_call.1} parent=1 // pred_region
      %s59 = ssub.s32 16, 16
      %60 = vsyncadd [#allocation4], %s59
      %s62 = sshll.u32 [#allocation7], 4
      %s63 = int_to_ptr.vmem [resolvable:$true] %s62
      %65 = dma.vmem_to_hbm [thread:$0]  %s63, 16, %s2, [#allocation4]
    $region21: #{tpu_custom_call.1} parent=1 // pred_fallthru
      _
    // Predicated region
    $region22: #{tpu_custom_call.1} parent=1 // pred_check
      _
    $region23: #{tpu_custom_call.1} parent=1 // pred_check_branch
      %67 = sbr.rel (0) target = $region25
    $region24: #{tpu_custom_call.1} parent=1 // pred_region
      %68 = dma.done [#allocation4], 16
    $region25: #{tpu_custom_call.1} parent=1 // pred_fallthru
      _
    %69 = vsyncpa [#allocation3], 1
    %70 = vsyncpa [#allocation6], 1
    %71 = vsyncpa [#allocation4], 1

</llo_original>
